<compile_context>
chip_gen: v6e
topology: v6e:2x2x1
jax: 0.10.0
libtpu: 0.0.40
codegen_flags: <defaults>
</compile_context>

<pallas_src>
import functools
import math

import jax
import jax.numpy as jnp
from jax import lax
from jax.experimental import pallas as pl
from jax.experimental.pallas import tpu as pltpu

_INV_SQRT2 = 1.0 / math.sqrt(2.0)


def _gelu(h, approximate):
    if approximate:
        # tanh-approx GELU -> transcendental goes to the EUP slot (frees VALU).
        # Numerics differ slightly from torch's default exact-erf GELU.
        return jax.nn.gelu(h, approximate=True)
    return 0.5 * h * (1.0 + lax.erf(h * _INV_SQRT2))


# ---------------------------------------------------------------------------
# Kernels
# ---------------------------------------------------------------------------
def _mlp_kernel_resident(x_ref, w1_ref, b1_ref, w2_ref, b2_ref, o_ref,
                         *, approx_gelu):
    """Weights fully VMEM-resident; one row tile per grid step."""
    x = x_ref[...].astype(w1_ref.dtype)                       # in-kernel MXU cast
    h = jnp.dot(x, w1_ref[...], preferred_element_type=jnp.float32)
    h = _gelu(h + b1_ref[...], approx_gelu)
    # dropout: inference-mode identity.
    # TODO(synk): training-mode stochastic dropout via pltpu.prng_random_bits.
    y = jnp.dot(h.astype(w2_ref.dtype), w2_ref[...],
                preferred_element_type=jnp.float32)
    o_ref[...] = (y + b2_ref[...]).astype(o_ref.dtype)


def _mlp_kernel_tiled(x_ref, w1_ref, b1_ref, w2_ref, b2_ref, o_ref, acc_ref,
                      *, approx_gelu):
    """D-tiled path: grid = (row tiles, D tiles), f32 accumulator for fc2."""
    j = pl.program_id(1)

    x = x_ref[...].astype(w1_ref.dtype)
    h = jnp.dot(x, w1_ref[...], preferred_element_type=jnp.float32)
    h = _gelu(h + b1_ref[...], approx_gelu)
    part = jnp.dot(h.astype(w2_ref.dtype), w2_ref[...],
                   preferred_element_type=jnp.float32)

    @pl.when(j == 0)
    def _():                       # skip zero-init + first read-modify-write
        acc_ref[...] = part

    @pl.when(j > 0)
    def _():
        acc_ref[...] += part

    @pl.when(j == pl.num_programs(1) - 1)
    def _():
        o_ref[...] = (acc_ref[...] + b2_ref[...]).astype(o_ref.dtype)


# ---------------------------------------------------------------------------
# Wrapper
# ---------------------------------------------------------------------------
def _round_up(a, b):
    return ((a + b - 1) // b) * b


def _vmem_cap_bytes():
    """Generation-aware usable VMEM (leave headroom for internal scratch)."""
    try:
        info = pltpu.get_tpu_info()
        cap = getattr(info, "vmem_capacity_bytes", None)
        if cap:
            return int(cap * 3 // 4)      # 96 MiB on v5e/v6e, 48 MiB on v7x
    except Exception:
        pass
    return 48 << 20                       # safe on every generation


def mlp_forward(x, w1, b1, w2, b2, *, tm=256, td_max=1024,
                mxu_dtype=jnp.bfloat16, approx_gelu=False,
                max_weight_vmem_bytes=None):
    """x: (B, N, H). w1: (H, D), b1: (D,), w2: (D, H), b2: (H,)."""
    B, N, H = x.shape
    D = w1.shape[1]
    M = B * N
    out_dtype = x.dtype

    in_bytes = jnp.dtype(x.dtype).itemsize
    out_bytes = jnp.dtype(out_dtype).itemsize
    wb = jnp.dtype(mxu_dtype).itemsize

    cap = _vmem_cap_bytes()
    if max_weight_vmem_bytes is None:
        max_weight_vmem_bytes = cap

    # --- row tiling (bf16 sublane multiple = 16; also a multiple of f32's 8) --
    sub = 16
    tm_eff = min(tm, _round_up(M, sub))
    M_pad = _round_up(M, tm_eff)
    # Megacore: keep >=2 row tiles when there is enough work so the "parallel"
    # axis can be split across v7x's two TensorCores.
    if M_pad // tm_eff < 2 and M >= 8 * sub:
        tm_eff = _round_up((M + 1) // 2, sub)
        M_pad = 2 * tm_eff

    x2 = x.reshape(M, H)
    if M_pad != M:
        x2 = jnp.pad(x2, ((0, M_pad - M), (0, 0)))

    # Weights cast to the MXU dtype once per call (cache these in a real model
    # instead of re-casting every call); biases stay f32.
    w1c = w1.astype(mxu_dtype)
    w2c = w2.astype(mxu_dtype)
    b1_2 = b1.reshape(1, D).astype(jnp.float32)
    b2_2 = b2.reshape(1, H).astype(jnp.float32)

    kern_kwargs = dict(approx_gelu=approx_gelu)

    # --- resident path: W1/W2 fully in VMEM, 1-D grid over row tiles ---------
    resident_bytes = (2 * (H * D + D * H) * wb          # weights (2 buffers)
                      + 2 * (D + H) * 4                  # biases
                      + 2 * tm_eff * H * in_bytes        # x tiles
                      + 2 * tm_eff * H * out_bytes)      # out tiles
    use_resident = resident_bytes <= min(cap, max_weight_vmem_bytes)

    if use_resident:
        vmem_limit = int(min(cap, max(resident_bytes * 3 // 2, 16 << 20)))
        out = pl.pallas_call(
            functools.partial(_mlp_kernel_resident, **kern_kwargs),
            out_shape=jax.ShapeDtypeStruct((M_pad, H), out_dtype),
            grid_spec=pltpu.PrefetchScalarGridSpec(
                num_scalar_prefetch=0,
                grid=(M_pad // tm_eff,),
                in_specs=[
                    pl.BlockSpec((tm_eff, H), lambda i: (i, 0)),   # x rows
                    pl.BlockSpec((H, D), lambda i: (0, 0)),        # W1 (whole)
                    pl.BlockSpec((1, D), lambda i: (0, 0)),        # b1
                    pl.BlockSpec((D, H), lambda i: (0, 0)),        # W2 (whole)
                    pl.BlockSpec((1, H), lambda i: (0, 0)),        # b2
                ],
                out_specs=pl.BlockSpec((tm_eff, H), lambda i: (i, 0)),
            ),
            compiler_params=pltpu.CompilerParams(
                dimension_semantics=("parallel",),
                vmem_limit_bytes=vmem_limit,
            ),
        )(x2, w1c, b1_2, w2c, b2_2)
        return out[:M].reshape(B, N, H)

    # --- tiled fallback: D does not fit; tile it with an f32 accumulator -----
    # Largest 128-aligned td (<= td_max) whose working set fits the budget.
    td = 128
    for cand in range(_round_up(min(max(td_max, 128), max(D, 128)), 128), 127, -128):
        est = (2 * tm_eff * H * in_bytes
               + 2 * (H * cand + cand * H) * wb
               + 2 * (cand + H) * 4
               + 2 * tm_eff * H * out_bytes
               + tm_eff * H * 4)                         # f32 accumulator
        if est <= cap:
            td = cand
            break

    D_pad = _round_up(D, td)
    if D_pad != D:
        # Exact: padded fc1 columns feed zero-padded W2 rows -> contribute 0.
        w1c = jnp.pad(w1c, ((0, 0), (0, D_pad - D)))
        b1_2 = jnp.pad(b1_2, ((0, 0), (0, D_pad - D)))
        w2c = jnp.pad(w2c, ((0, D_pad - D), (0, 0)))

    est = (2 * tm_eff * H * in_bytes
           + 2 * (H * td + td * H) * wb
           + 2 * (td + H) * 4
           + 2 * tm_eff * H * out_bytes
           + tm_eff * H * 4)
    vmem_limit = int(min(cap, max(est * 3 // 2, 16 << 20)))

    out = pl.pallas_call(
        functools.partial(_mlp_kernel_tiled, **kern_kwargs),
        out_shape=jax.ShapeDtypeStruct((M_pad, H), out_dtype),
        grid_spec=pltpu.PrefetchScalarGridSpec(
            num_scalar_prefetch=0,
            grid=(M_pad // tm_eff, D_pad // td),
            in_specs=[
                pl.BlockSpec((tm_eff, H), lambda i, j: (i, 0)),    # x rows
                pl.BlockSpec((H, td), lambda i, j: (0, j)),        # W1 col tile
                pl.BlockSpec((1, td), lambda i, j: (0, j)),        # b1 tile
                pl.BlockSpec((td, H), lambda i, j: (j, 0)),        # W2 row tile
                pl.BlockSpec((1, H), lambda i, j: (0, 0)),         # b2 (whole)
            ],
            out_specs=pl.BlockSpec((tm_eff, H), lambda i, j: (i, 0)),
            scratch_shapes=[pltpu.VMEM((tm_eff, H), jnp.float32)],
        ),
        compiler_params=pltpu.CompilerParams(
            dimension_semantics=("parallel", "arbitrary"),
            vmem_limit_bytes=vmem_limit,
        ),
    )(x2, w1c, b1_2, w2c, b2_2)

    return out[:M].reshape(B, N, H)


# ---------------------------------------------------------------------------
# Params / reference
# ---------------------------------------------------------------------------
def init_params(key, hidden_size, mlp_dim, dtype=jnp.float32):
    """Mirrors Mlp._init_weights: xavier_uniform_ weights, normal(std=1e-6) biases."""
    k1, k2, k3, k4 = jax.random.split(key, 4)

    def xavier_uniform(k, fan_in, fan_out, shape):
        bound = math.sqrt(6.0 / (fan_in + fan_out))
        return jax.random.uniform(k, shape, dtype, minval=-bound, maxval=bound)

    # Stored transposed relative to torch (in, out) so the kernel does x @ W.
    w1 = xavier_uniform(k1, hidden_size, mlp_dim, (hidden_size, mlp_dim))
    w2 = xavier_uniform(k2, mlp_dim, hidden_size, (mlp_dim, hidden_size))
    b1 = 1e-6 * jax.random.normal(k3, (mlp_dim,), dtype)
    b2 = 1e-6 * jax.random.normal(k4, (hidden_size,), dtype)
    return w1, b1, w2, b2


def _reference(x, w1, b1, w2, b2):
    """Pure-JAX reference mirroring the kernel's bf16 MXU-input rounding."""
    B, N, H = x.shape
    xb = x.reshape(-1, H).astype(jnp.bfloat16).astype(jnp.float32)
    w1b = w1.astype(jnp.bfloat16).astype(jnp.float32)
    w2b = w2.astype(jnp.bfloat16).astype(jnp.float32)
    h = xb @ w1b + b1
    h = 0.5 * h * (1.0 + lax.erf(h * _INV_SQRT2))
    h = h.astype(jnp.bfloat16).astype(jnp.float32)
    return (h @ w2b + b2).reshape(B, N, H)


if __name__ == "__main__":
    key = jax.random.PRNGKey(0)
    kx, kp, kx2, kp2 = jax.random.split(key, 4)

    # --- test 1: weight-resident fast path -------------------------------
    batch, seq, hidden_size, mlp_dim = 2, 8, 32, 64
    x = jax.random.normal(kx, (batch, seq, hidden_size), jnp.float32)
    w1, b1, w2, b2 = init_params(kp, hidden_size, mlp_dim)

    y = jax.block_until_ready(mlp_forward(x, w1, b1, w2, b2))
    assert y.shape == (batch, seq, hidden_size)
    y_ref = _reference(x, w1, b1, w2, b2)
    assert jnp.allclose(y, y_ref, atol=1e-2, rtol=1e-2), (
        float(jnp.max(jnp.abs(y - y_ref))))

    # --- test 2: force the D-tiled accumulator path ----------------------
    mlp_dim2 = 256
    x2 = jax.random.normal(kx2, (batch, seq, hidden_size), jnp.float32)
    w1b_, b1b_, w2b_, b2b_ = init_params(kp2, hidden_size, mlp_dim2)
    y2 = jax.block_until_ready(
        mlp_forward(x2, w1b_, b1b_, w2b_, b2b_,
                    td_max=128, max_weight_vmem_bytes=0))
    y2_ref = _reference(x2, w1b_, b1b_, w2b_, b2b_)
    assert jnp.allclose(y2, y2_ref, atol=1e-2, rtol=1e-2), (
        float(jnp.max(jnp.abs(y2 - y2_ref))))

    print("KERNEL_OK")
</pallas_src>

<mosaic_0001>
module attributes {stable_mosaic.version = 11 : i64} {
  func.func @_mlp_kernel_resident(%arg0: i32, %arg1: memref<16x32xf32, #tpu.memory_space<vmem>>, %arg2: memref<32x64xbf16, #tpu.memory_space<vmem>>, %arg3: memref<1x64xf32, #tpu.memory_space<vmem>>, %arg4: memref<64x32xbf16, #tpu.memory_space<vmem>>, %arg5: memref<1x32xf32, #tpu.memory_space<vmem>>, %arg6: memref<16x32xf32, #tpu.memory_space<vmem>>) attributes {dimension_semantics = [#tpu.dimension_semantics<parallel>], iteration_bounds = array<i64: 1>, scalar_prefetch = 0 : i64, scratch_operands = 0 : i64, tpu.core_type = #tpu.core_type<tc>, window_params = [{transform_indices = @transform_0, window_bounds = array<i64: 16, 32>}, {pipeline_mode = #tpu.pipeline_mode<synchronous>, transform_indices = @transform_1, window_bounds = array<i64: 32, 64>}, {pipeline_mode = #tpu.pipeline_mode<synchronous>, transform_indices = @transform_2, window_bounds = array<i64: 1, 64>}, {pipeline_mode = #tpu.pipeline_mode<synchronous>, transform_indices = @transform_3, window_bounds = array<i64: 64, 32>}, {pipeline_mode = #tpu.pipeline_mode<synchronous>, transform_indices = @transform_4, window_bounds = array<i64: 1, 32>}, {transform_indices = @transform_5, window_bounds = array<i64: 16, 32>}]} {
    %c0 = arith.constant 0 : index
    %c0_0 = arith.constant 0 : index
    %0 = vector.load %arg1[%c0, %c0_0] : memref<16x32xf32, #tpu.memory_space<vmem>>, vector<16x32xf32>
    %1 = arith.truncf %0 : vector<16x32xf32> to vector<16x32xbf16>
    %c0_1 = arith.constant 0 : index
    %c0_2 = arith.constant 0 : index
    %2 = vector.load %arg2[%c0_1, %c0_2] : memref<32x64xbf16, #tpu.memory_space<vmem>>, vector<32x64xbf16>
    %cst = arith.constant dense<0.000000e+00> : vector<16x64xf32>
    %3 = tpu.matmul %1, %2, %cst {dimension_numbers = #tpu.dot_dimension_numbers<[1], [0], [0], [1], [0, 0, 1, 1], [], []>} : vector<16x32xbf16>, vector<32x64xbf16>, vector<16x64xf32> -> vector<16x64xf32>
    %c0_3 = arith.constant 0 : index
    %c0_4 = arith.constant 0 : index
    %4 = vector.load %arg3[%c0_3, %c0_4] : memref<1x64xf32, #tpu.memory_space<vmem>>, vector<1x64xf32>
    %5 = vector.broadcast %4 : vector<1x64xf32> to vector<16x64xf32>
    %6 = arith.addf %3, %5 : vector<16x64xf32>
    %cst_5 = arith.constant 5.000000e-01 : f32
    %7 = vector.broadcast %cst_5 : f32 to vector<16x64xf32>
    %8 = arith.mulf %7, %6 : vector<16x64xf32>
    %cst_6 = arith.constant 0.707106769 : f32
    %9 = vector.broadcast %cst_6 : f32 to vector<16x64xf32>
    %10 = arith.mulf %6, %9 : vector<16x64xf32>
    %11 = math.erf %10 : vector<16x64xf32>
    %cst_7 = arith.constant 1.000000e+00 : f32
    %12 = vector.broadcast %cst_7 : f32 to vector<16x64xf32>
    %13 = arith.addf %12, %11 : vector<16x64xf32>
    %14 = arith.mulf %8, %13 : vector<16x64xf32>
    %15 = arith.truncf %14 : vector<16x64xf32> to vector<16x64xbf16>
    %c0_8 = arith.constant 0 : index
    %c0_9 = arith.constant 0 : index
    %16 = vector.load %arg4[%c0_8, %c0_9] : memref<64x32xbf16, #tpu.memory_space<vmem>>, vector<64x32xbf16>
    %cst_10 = arith.constant dense<0.000000e+00> : vector<16x32xf32>
    %17 = tpu.matmul %15, %16, %cst_10 {dimension_numbers = #tpu.dot_dimension_numbers<[1], [0], [0], [1], [0, 0, 1, 1], [], []>} : vector<16x64xbf16>, vector<64x32xbf16>, vector<16x32xf32> -> vector<16x32xf32>
    %c0_11 = arith.constant 0 : index
    %c0_12 = arith.constant 0 : index
    %18 = vector.load %arg5[%c0_11, %c0_12] : memref<1x32xf32, #tpu.memory_space<vmem>>, vector<1x32xf32>
    %19 = vector.broadcast %18 : vector<1x32xf32> to vector<16x32xf32>
    %20 = arith.addf %17, %19 : vector<16x32xf32>
    %c0_13 = arith.constant 0 : index
    %c0_14 = arith.constant 0 : index
    %21 = vector.load %arg6[%c0_13, %c0_14] : memref<16x32xf32, #tpu.memory_space<vmem>>, vector<16x32xf32>
    tpu.vector_store %arg6[%c0_13, %c0_14], %20 {strides = array<i32>} : memref<16x32xf32, #tpu.memory_space<vmem>>, vector<16x32xf32>,
    return
  }
  func.func @transform_0(%arg0: i32) -> (i32, i32) {
    %c0_i32 = arith.constant 0 : i32
    %c0_i32_0 = arith.constant 0 : i32
    return %arg0, %c0_i32 : i32, i32
  }
  func.func @transform_1(%arg0: i32) -> (i32, i32) {
    %c0_i32 = arith.constant 0 : i32
    %c0_i32_0 = arith.constant 0 : i32
    %c0_i32_1 = arith.constant 0 : i32
    return %c0_i32, %c0_i32_0 : i32, i32
  }
  func.func @transform_2(%arg0: i32) -> (i32, i32) {
    %c0_i32 = arith.constant 0 : i32
    %c0_i32_0 = arith.constant 0 : i32
    %c0_i32_1 = arith.constant 0 : i32
    return %c0_i32, %c0_i32_0 : i32, i32
  }
  func.func @transform_3(%arg0: i32) -> (i32, i32) {
    %c0_i32 = arith.constant 0 : i32
    %c0_i32_0 = arith.constant 0 : i32
    %c0_i32_1 = arith.constant 0 : i32
    return %c0_i32, %c0_i32_0 : i32, i32
  }
  func.func @transform_4(%arg0: i32) -> (i32, i32) {
    %c0_i32 = arith.constant 0 : i32
    %c0_i32_0 = arith.constant 0 : i32
    %c0_i32_1 = arith.constant 0 : i32
    return %c0_i32, %c0_i32_0 : i32, i32
  }
  func.func @transform_5(%arg0: i32) -> (i32, i32) {
    %c0_i32 = arith.constant 0 : i32
    %c0_i32_0 = arith.constant 0 : i32
    return %arg0, %c0_i32 : i32, i32
  }
}

</mosaic_0001>

<llo_original>
// kernel: tpu_custom_call.1
$region0: #{tpu_custom_call.1}
  #allocation0 [shape = 'u32[]', space=smem, size = 0x4, offset = 0x4, fixed_abs, tag = 'smem constant byte address 0x4 - core index']
  #allocation1 [shape = 'u32[144,128]{1,0:T(1,128)}', space=vmem, size = 0x12000, scoped, tag = 'internal scratch']
  %s0 = inlined_call_operand.vmem [shape: f32[16,32], index: 0, kind: input, shape index: {}]
  %s1 = inlined_call_operand.vmem [shape: bf16[32,64], index: 1, kind: input, shape index: {}]
  %s2 = inlined_call_operand.vmem [shape: f32[1,64], index: 2, kind: input, shape index: {}]
  %s3 = inlined_call_operand.vmem [shape: bf16[64,32], index: 3, kind: input, shape index: {}]
  %s4 = inlined_call_operand.vmem [shape: f32[1,32], index: 4, kind: input, shape index: {}]
  %s5 = inlined_call_operand.hbm [shape: f32[16,32], index: 5, kind: output, shape index: {}]
  %s6 = sld [smem:[#allocation0]]
  $region30: #{tpu_custom_call.1} parent=0
    _
  %s8 = ssub.s32 1, %s6
  %s9 = scalar_select 0, %s8, %s6
  $region1: #{tpu_custom_call.1} parent=0
    #allocation2 [shape = 'u8[8192]{0}', space=vmem, size = 0x2000, scoped, tag = 'output window, operand 0, single buffered']
    #allocation3 [shape = 's32[1]{0}', space=sflag, size = 0x4, scoped, tag = 'scoped memory for tpu_custom_call.1']
    %10 = vsyncpa [#allocation3], 0
    // Predicated region
    $region2: #{tpu_custom_call.1} parent=1 // pred_check
      _
    $region3: #{tpu_custom_call.1} parent=1 // pred_check_branch
      %12 = sbr.rel (0) target = $region5
    $region4: #{tpu_custom_call.1} parent=1 // pred_region
      _
    $region5: #{tpu_custom_call.1} parent=1 // pred_fallthru
      _
    // Predicated region
    $region6: #{tpu_custom_call.1} parent=1 // pred_check
      _
    $region7: #{tpu_custom_call.1} parent=1 // pred_check_branch
      %14 = sbr.rel (0) target = $region9
    $region8: #{tpu_custom_call.1} parent=1 // pred_region
      _
    $region9: #{tpu_custom_call.1} parent=1 // pred_fallthru
      _
    // Predicated region
    $region10: #{tpu_custom_call.1} parent=1 // pred_check
      _
    $region11: #{tpu_custom_call.1} parent=1 // pred_check_branch
      %16 = sbr.rel (0) target = $region13
    $region12: #{tpu_custom_call.1} parent=1 // pred_region
      _
    $region13: #{tpu_custom_call.1} parent=1 // pred_fallthru
      _
    // Predicated region
    $region14: #{tpu_custom_call.1} parent=1 // pred_check
      _
    $region15: #{tpu_custom_call.1} parent=1 // pred_check_branch
      %18 = sbr.rel (0) target = $region17
    $region16: #{tpu_custom_call.1} parent=1 // pred_region
      _
    $region17: #{tpu_custom_call.1} parent=1 // pred_fallthru
      _
    // Predicated region
    $region18: #{tpu_custom_call.1} parent=1 // pred_check
      _
    $region19: #{tpu_custom_call.1} parent=1 // pred_check_branch
      %20 = sbr.rel (0) target = $region21
    $region20: #{tpu_custom_call.1} parent=1 // pred_region
      _
    $region21: #{tpu_custom_call.1} parent=1 // pred_fallthru
      _
    %v22 = vld [vmem:[%s0] sm:$0xff]
    %v23 = vld [vmem:[%s0 + $0x8] sm:$0xff]
    %v24 = vpack.c.bf16 %v23, %v22
    %v25 = vld [vmem:[%s1] sm:$0xf]
    %v26 = vld [vmem:[%s1 + $0x4] sm:$0xf]
    %v27 = vld [vmem:[%s1 + $0x8] sm:$0xf]
    %v28 = vld [vmem:[%s1 + $0xc] sm:$0xf]
    %v29 = vld [vmem:[%s2] sm:$0x1]
    %v31 = vlaneseq
    %v32 = vshrl.u32 %v31, 7
    %v33 = vsub.s32 0, %v32
    %v34 = vrot.slane %v29, %v33
    %v40 = vunpack.c.l.b16 %v25
    %v41 = vunpack.c.l.b16 %v26
    %v42 = vunpack.c.l.b16 %v27
    %v43 = vunpack.c.l.b16 %v28
    %v44 = vpack.c.b16 %v41, %v40
    %v45 = vpack.c.b16 %v43, %v42
    %vm48 = vcmask 261120
    %v50 = vsel %vm48, %v24, 0
    %52 = vmatprep.subr.bf16.mxu0 0
    %53 = vmatpush1.bf16.msra.mxu0 0
    %54 = vmatprep.subr.bf16.mxu0 0
    %55 = vmatpush1.bf16.msra.mxu0 0
    %56 = vmatprep.subr.bf16.mxu0 0
    %57 = vmatpush1.bf16.msra.mxu0 0
    %58 = vmatprep.subr.bf16.mxu0 0
    %59 = vmatpush1.bf16.msra.mxu0 0
    %60 = vmatprep.subr.bf16.mxu0 0
    %61 = vmatpush1.bf16.msra.mxu0 0
    %62 = vmatprep.subr.bf16.mxu0 0
    %63 = vmatpush1.bf16.msra.mxu0 0
    %64 = vmatprep.subr.bf16.mxu0 0
    %65 = vmatpush1.bf16.msra.mxu0 %v45
    %66 = vmatprep.subr.bf16.mxu0 0
    %67 = vmatpush1.bf16.msra.mxu0 %v44
    %68 = vmatprep.subr.bf16.mxu0 0
    %69 = vmatpush2.bf16.msra.mxu0 0
    %70 = vmatprep.subr.bf16.mxu0 0
    %71 = vmatpush2.bf16.msra.mxu0 0
    %72 = vmatprep.subr.bf16.mxu0 0
    %73 = vmatpush2.bf16.msra.mxu0 0
    %74 = vmatprep.subr.bf16.mxu0 0
    %75 = vmatpush2.bf16.msra.mxu0 0
    %76 = vmatprep.subr.bf16.mxu0 0
    %77 = vmatpush2.bf16.msra.mxu0 0
    %78 = vmatprep.subr.bf16.mxu0 0
    %79 = vmatpush2.bf16.msra.mxu0 0
    %80 = vmatprep.subr.bf16.mxu0 0
    %81 = vmatpush2.bf16.msra.mxu0 0
    %82 = vmatprep.subr.bf16.mxu0 0
    %83 = vmatpush2.bf16.msra.mxu0 0
    %84 = vmatprep.mubr.bf16.mxu0 0
    %85 = vmatmul.mubr.bf16.gmra.mxu0 %v50
    %v86 = vpop.f32.mrf.mxu0
    %v87 = vadd.f32 %v34, %v86
    %v88 = vpop.f32.mrf.mxu0
    %v89 = vpop.f32.mrf.mxu0
    %v90 = vadd.f32 %v34, %v89
    %v91 = vpop.f32.mrf.mxu0
    %92 = vdwg.mxu0
    %v93 = vmul.f32 %v87, 0.5
    %v94 = vmul.f32 %v90, 0.5
    %v95 = vmul.f32 %v87, 0.70710677
    %v96 = vmul.f32 %v90, 0.70710677
    %v97 = verf.f32.pop %v95
    %v98 = verf.f32.pop %v96
    %v99 = vadd.f32 %v97, 1.0
    %v100 = vadd.f32 %v98, 1.0
    %v101 = vmul.f32 %v93, %v99
    %v102 = vmul.f32 %v94, %v100
    %v103 = vpack.c.bf16 %v102, %v101
    %v104 = vld [vmem:[%s3] sm:$0xf]
    %v105 = vld [vmem:[%s3 + $0x4] sm:$0xf]
    %v106 = vld [vmem:[%s3 + $0x8] sm:$0xf]
    %v107 = vld [vmem:[%s3 + $0xc] sm:$0xf]
    %v108 = vld [vmem:[%s3 + $0x10] sm:$0xf]
    %v109 = vld [vmem:[%s3 + $0x14] sm:$0xf]
    %v110 = vld [vmem:[%s3 + $0x18] sm:$0xf]
    %v111 = vld [vmem:[%s3 + $0x1c] sm:$0xf]
    %v112 = vld [vmem:[%s4] sm:$0x1]
    %v114 = vlaneseq
    %v115 = vshrl.u32 %v114, 7
    %v116 = vsub.s32 0, %v115
    %v117 = vrot.slane %v112, %v116
    %v127 = vunpack.c.l.b16 %v104
    %v128 = vunpack.c.l.b16 %v105
    %v129 = vunpack.c.l.b16 %v106
    %v130 = vunpack.c.l.b16 %v107
    %v131 = vunpack.c.l.b16 %v108
    %v132 = vunpack.c.l.b16 %v109
    %v133 = vunpack.c.l.b16 %v110
    %v134 = vunpack.c.l.b16 %v111
    %v135 = vpack.c.b16 %v128, %v127
    %v136 = vpack.c.b16 %v130, %v129
    %v137 = vpack.c.b16 %v132, %v131
    %v138 = vpack.c.b16 %v134, %v133
    %vm143 = vcmask 523264
    %v145 = vsel %vm143, %v103, 0
    %147 = vmatprep.subr.bf16.mxu0 0
    %148 = vmatpush1.bf16.msra.mxu0 0
    %149 = vmatprep.subr.bf16.mxu0 0
    %150 = vmatpush1.bf16.msra.mxu0 0
    %151 = vmatprep.subr.bf16.mxu0 0
    %152 = vmatpush1.bf16.msra.mxu0 0
    %153 = vmatprep.subr.bf16.mxu0 0
    %154 = vmatpush1.bf16.msra.mxu0 0
    %155 = vmatprep.subr.bf16.mxu0 0
    %156 = vmatpush1.bf16.msra.mxu0 %v138
    %157 = vmatprep.subr.bf16.mxu0 0
    %158 = vmatpush1.bf16.msra.mxu0 %v137
    %159 = vmatprep.subr.bf16.mxu0 0
    %160 = vmatpush1.bf16.msra.mxu0 %v136
    %161 = vmatprep.subr.bf16.mxu0 0
    %162 = vmatpush1.bf16.msra.mxu0 %v135
    %163 = vmatprep.subr.bf16.mxu0 0
    %164 = vmatpush2.bf16.msra.mxu0 0
    %165 = vmatprep.subr.bf16.mxu0 0
    %166 = vmatpush2.bf16.msra.mxu0 0
    %167 = vmatprep.subr.bf16.mxu0 0
    %168 = vmatpush2.bf16.msra.mxu0 0
    %169 = vmatprep.subr.bf16.mxu0 0
    %170 = vmatpush2.bf16.msra.mxu0 0
    %171 = vmatprep.subr.bf16.mxu0 0
    %172 = vmatpush2.bf16.msra.mxu0 0
    %173 = vmatprep.subr.bf16.mxu0 0
    %174 = vmatpush2.bf16.msra.mxu0 0
    %175 = vmatprep.subr.bf16.mxu0 0
    %176 = vmatpush2.bf16.msra.mxu0 0
    %177 = vmatprep.subr.bf16.mxu0 0
    %178 = vmatpush2.bf16.msra.mxu0 0
    %179 = vmatprep.mubr.bf16.mxu0 0
    %180 = vmatmul.mubr.bf16.gmra.mxu0 %v145
    %v181 = vpop.f32.mrf.mxu0
    %v182 = vadd.f32 %v117, %v181
    %v183 = vpop.f32.mrf.mxu0
    %v184 = vpop.f32.mrf.mxu0
    %v185 = vadd.f32 %v117, %v184
    %v186 = vpop.f32.mrf.mxu0
    %187 = vdwg.mxu0
    %188 = vst.msk [vmem:[#allocation2] sm:$0xff] %vm48, %v182
    %189 = vst.msk [vmem:[#allocation2 + $0x8] sm:$0xff] %vm48, %v185
    // Predicated region
    $region22: #{tpu_custom_call.1} parent=1 // pred_check
      _
    $region23: #{tpu_custom_call.1} parent=1 // pred_check_branch
      %191 = sbr.rel (0) target = $region25
    $region24: #{tpu_custom_call.1} parent=1 // pred_region
      %s193 = ssub.s32 256, 256
      %194 = vsyncadd [#allocation3], %s193
      %s195 = sshll.u32 [#allocation2], 4
      %s196 = int_to_ptr.vmem [resolvable:$true] %s195
      %201 = dma.vmem_to_hbm [thread:$0]  %s196, 256, %s5, [#allocation3], 128, 128, 8
    $region25: #{tpu_custom_call.1} parent=1 // pred_fallthru
      _
    // Predicated region
    $region26: #{tpu_custom_call.1} parent=1 // pred_check
      _
    $region27: #{tpu_custom_call.1} parent=1 // pred_check_branch
      %203 = sbr.rel (0) target = $region29
    $region28: #{tpu_custom_call.1} parent=1 // pred_region
      %204 = dma.done [#allocation3], 256
    $region29: #{tpu_custom_call.1} parent=1 // pred_fallthru
      _
    %205 = vsyncpa [#allocation3], 1

</llo_original>
